<compile_context>
chip_gen: v7x
topology: tpu7x:2x2x1
jax: 0.10.0
libtpu: 0.0.40
codegen_flags: <defaults>
</compile_context>

<pallas_src>
import functools

import jax
import jax.numpy as jnp
from jax.experimental import pallas as pl
from jax.experimental.pallas import tpu as pltpu


def _round_up(x, m):
    return (x + m - 1) // m * m


def _log_sigmoid(x):
    # numerically stable log(sigmoid(x)) = min(x, 0) - log1p(exp(-|x|))
    return jnp.minimum(x, 0.0) - jnp.log1p(jnp.exp(-jnp.abs(x)))


def _neg_sampling_kernel(t_ref, o_ref, out_ref, acc_ref, *,
                         block_b, num_neg, dim, batch, tiles_per_split, has_pad):
    """One (block_b)-row batch tile.

    t_ref  : (block_b, D)        bf16  gathered input_emb[target] rows
    o_ref  : (block_b, (K+1)*D)  bf16  [context | neg_0 | ... | neg_{K-1}] rows
    out_ref: (1, 1, K+1)         f32   per-core column sums (written last step)
    acc_ref: (block_b, K+1)      f32   per-row running log-sigmoid partials
    """
    kp1 = num_neg + 1
    w = kp1 * dim
    core = pl.program_id(0)
    it = pl.program_id(1)

    @pl.when(it == 0)
    def _init():
        acc_ref[...] = jnp.zeros_like(acc_ref)

    # Single upcast per operand; everything downstream stays f32.
    t = t_ref[...].astype(jnp.float32)                       # (Bt, D)
    o = o_ref[...].astype(jnp.float32)                       # (Bt, (K+1)*D)
    prod = jnp.tile(t, (1, kp1)) * o                          # (Bt, (K+1)*D)

    # Signed block-diagonal reduction matrix ((K+1)*D, K+1):
    #   column 0  -> +1 over the context segment   (+positive score)
    #   column k>0 -> -1 over negative segment k-1 (-negative score)
    # so one MXU matmul yields all K+1 per-row scores with the sign pre-applied
    # and a single log-sigmoid covers both loss branches.
    r_idx = jax.lax.broadcasted_iota(jnp.int32, (w, kp1), 0)
    c_idx = jax.lax.broadcasted_iota(jnp.int32, (w, kp1), 1)
    in_seg = (r_idx >= c_idx * dim) & (r_idx < (c_idx + 1) * dim)
    red_mat = jnp.where(in_seg, jnp.where(c_idx == 0, 1.0, -1.0),
                        0.0).astype(jnp.float32)

    scores = jnp.dot(prod, red_mat, preferred_element_type=jnp.float32)  # (Bt, K+1)
    ls = _log_sigmoid(scores)                                            # (Bt, K+1)

    base = (core * tiles_per_split + it) * block_b
    if has_pad:
        # Padding exists (static fact): mask only tiles that straddle/pass the
        # end of the real batch; full tiles accumulate unmasked.
        @pl.when(base + block_b <= batch)
        def _full_tile():
            acc_ref[...] += ls

        @pl.when(base + block_b > batch)
        def _tail_tile():
            rows = base + jax.lax.broadcasted_iota(jnp.int32, (block_b, kp1), 0)
            acc_ref[...] += jnp.where(rows < batch, ls, 0.0)
    else:
        acc_ref[...] += ls

    @pl.when(it == tiles_per_split - 1)
    def _finalize():
        # One sublane reduce + one tiny store per core per kernel call.
        out_ref[...] = jnp.sum(acc_ref[...], axis=0, keepdims=True)[None]


def _vmem_info():
    cap = 64 * 1024 * 1024            # conservative fallback = v7x physical VMEM
    try:
        cap = int(pltpu.get_tpu_info().vmem_capacity_bytes)
    except Exception:
        pass
    tile_budget = min(cap // 4, 24 * 1024 * 1024)
    vmem_limit = min((cap * 3) // 4, 96 * 1024 * 1024)
    return tile_budget, vmem_limit


def _choose_block_b(batch, num_neg, dim, num_splits, budget_bytes):
    """Largest batch tile that keeps bf16 double buffers + in-kernel f32
    working copies (t, o, tiled-t, product) + the accumulator under budget,
    accounting for 128-lane padding of every row slab."""
    d_pad = _round_up(dim, 128)
    w_pad = _round_up((num_neg + 1) * dim, 128)
    in_bytes = 2 * 2 * (d_pad + w_pad)              # bf16 inputs, double-buffered
    work_bytes = 4 * (d_pad + 3 * w_pad + 128)      # f32 temporaries per row
    acc_bytes = 4 * 128                             # f32 accumulator row (padded)
    per_row = in_bytes + work_bytes + acc_bytes
    bb = budget_bytes // per_row
    bb = max(16, min(1024, (bb // 16) * 16))        # multiple of 16 (bf16 packing)
    per_core = -(-batch // num_splits)
    bb = min(bb, _round_up(per_core, 16))           # don't tile far past the batch
    return max(16, bb)


def negative_sampling_losses(input_emb, output_emb, target_words, context_words,
                             negative_words, *, block_b=None, num_core_splits=2,
                             io_dtype=jnp.bfloat16):
    """Forward pass equivalent to NegativeSamplingPyTorch.forward.

    input_emb:  (V, D) float32      output_emb: (V, D) float32
    target_words / context_words: (B,) int32   negative_words: (B, K) int32
    returns (positive_loss, negative_loss) float32 scalars.
    """
    batch = int(target_words.shape[0])
    num_neg = int(negative_words.shape[1])
    dim = int(input_emb.shape[1])
    kp1 = num_neg + 1
    w = kp1 * dim

    tile_budget, vmem_limit = _vmem_info()
    if block_b is None:
        block_b = _choose_block_b(batch, num_neg, dim, num_core_splits, tile_budget)
    block_b = max(16, (int(block_b) // 16) * 16)

    span = num_core_splits * block_b
    batch_p = _round_up(batch, span)
    tiles_per_split = batch_p // span
    pad = batch_p - batch

    if pad:
        target_words = jnp.pad(target_words, (0, pad))
        context_words = jnp.pad(context_words, (0, pad))
        negative_words = jnp.pad(negative_words, ((0, pad), (0, 0)))

    # Gathers stay in XLA glue (see TODO at top of file); the gathered rows are
    # consolidated into two lane-dense slabs and cast to bf16 to halve the
    # intermediate HBM traffic.
    t_slab = jnp.take(input_emb, target_words, axis=0).astype(io_dtype)      # (Bp, D)
    out_idx = jnp.concatenate([context_words[:, None], negative_words], axis=1)
    o_slab = (jnp.take(output_emb, out_idx.reshape(-1), axis=0)
              .reshape(batch_p, w).astype(io_dtype))                         # (Bp, (K+1)*D)

    kernel = functools.partial(
        _neg_sampling_kernel, block_b=block_b, num_neg=num_neg, dim=dim,
        batch=batch, tiles_per_split=tiles_per_split, has_pad=bool(pad))

    row_map = lambda c, i: (c * tiles_per_split + i, 0)

    parts = pl.pallas_call(
        kernel,
        out_shape=jax.ShapeDtypeStruct((num_core_splits, 1, kp1), jnp.float32),
        grid_spec=pltpu.PrefetchScalarGridSpec(
            num_scalar_prefetch=0,
            grid=(num_core_splits, tiles_per_split),
            in_specs=[
                pl.BlockSpec((block_b, dim), row_map),
                pl.BlockSpec((block_b, w), row_map),
            ],
            out_specs=pl.BlockSpec((1, 1, kp1), lambda c, i: (c, 0, 0)),
            scratch_shapes=[pltpu.VMEM((block_b, kp1), jnp.float32)],
        ),
        compiler_params=pltpu.CompilerParams(
            dimension_semantics=("parallel", "arbitrary"),
            vmem_limit_bytes=int(vmem_limit)),
    )(t_slab, o_slab)

    # Combine the per-core partial sums; scale and negate (mean + minus sign).
    positive_loss = -jnp.sum(parts[:, 0, 0]) / batch
    negative_loss = -jnp.sum(parts[:, 0, 1:]) / (batch * num_neg)
    return positive_loss, negative_loss


def init_params(key, vocab_size, embedding_dim):
    """Deterministic init matching the PyTorch module's _init_embeddings."""
    bound = 0.5 / embedding_dim
    input_emb = jax.random.uniform(
        key, (vocab_size, embedding_dim), jnp.float32, minval=-bound, maxval=bound)
    output_emb = jnp.zeros((vocab_size, embedding_dim), jnp.float32)
    return input_emb, output_emb


def _reference(input_emb, output_emb, target_words, context_words, negative_words):
    t = jnp.take(input_emb, target_words, axis=0)
    c = jnp.take(output_emb, context_words, axis=0)
    n = jnp.take(output_emb, negative_words, axis=0)
    pos_scores = jnp.sum(t * c, axis=1)
    pos_loss = -jnp.mean(jax.nn.log_sigmoid(pos_scores))
    neg_scores = jnp.sum(t[:, None, :] * n, axis=2)
    neg_loss = -jnp.mean(jax.nn.log_sigmoid(-neg_scores))
    return pos_loss, neg_loss


if __name__ == "__main__":
    vocab_size = 256
    embedding_dim = 32
    num_negative_samples = 5
    batch_size = 50          # deliberately NOT a multiple of the tile -> masked tail

    key = jax.random.PRNGKey(0)
    k_in, k_out, k_t, k_c, k_n = jax.random.split(key, 5)

    # Non-trivial tables so the check is meaningful (the module's init zeros the
    # output table, which makes every score identically 0).
    input_emb = 0.1 * jax.random.normal(k_in, (vocab_size, embedding_dim), jnp.float32)
    output_emb = 0.1 * jax.random.normal(k_out, (vocab_size, embedding_dim), jnp.float32)

    target_words = jax.random.randint(k_t, (batch_size,), 0, vocab_size, jnp.int32)
    context_words = jax.random.randint(k_c, (batch_size,), 0, vocab_size, jnp.int32)
    negative_words = jax.random.randint(
        k_n, (batch_size, num_negative_samples), 0, vocab_size, jnp.int32)

    # Small tile to exercise multi-step grid accumulation + tail masking + the
    # per-core partial-sum combine.
    pos_loss, neg_loss = negative_sampling_losses(
        input_emb, output_emb, target_words, context_words, negative_words,
        block_b=16)
    pos_loss = jax.block_until_ready(pos_loss)
    neg_loss = jax.block_until_ready(neg_loss)

    ref_pos, ref_neg = _reference(
        input_emb, output_emb, target_words, context_words, negative_words)
    assert jnp.allclose(pos_loss, ref_pos, rtol=1e-3, atol=1e-3), (pos_loss, ref_pos)
    assert jnp.allclose(neg_loss, ref_neg, rtol=1e-3, atol=1e-3), (neg_loss, ref_neg)

    # Module-style init (output table = zeros), default auto-tiled path.
    input_emb2, output_emb2 = init_params(k_in, vocab_size, embedding_dim)
    p2, n2 = negative_sampling_losses(
        input_emb2, output_emb2, target_words, context_words, negative_words)
    p2 = jax.block_until_ready(p2)
    n2 = jax.block_until_ready(n2)
    r2p, r2n = _reference(input_emb2, output_emb2, target_words, context_words,
                          negative_words)
    assert jnp.allclose(p2, r2p, atol=1e-4), (p2, r2p)
    assert jnp.allclose(n2, r2n, atol=1e-4), (n2, r2n)

    print("KERNEL_OK")
</pallas_src>

<mosaic_0001>
module attributes {stable_mosaic.version = 11 : i64} {
  func.func @_neg_sampling_kernel(%arg0: i32, %arg1: i32, %arg2: memref<16x32xbf16, #tpu.memory_space<vmem>>, %arg3: memref<16x192xbf16, #tpu.memory_space<vmem>>, %arg4: memref<1x1x6xf32, #tpu.memory_space<vmem>>, %arg5: memref<16x6xf32, #tpu.memory_space<vmem>>) attributes {dimension_semantics = [#tpu.dimension_semantics<parallel>, #tpu.dimension_semantics<arbitrary>], iteration_bounds = array<i64: 2, 2>, scalar_prefetch = 0 : i64, scratch_operands = 1 : i64, tpu.core_type = #tpu.core_type<tc>, window_params = [{transform_indices = @transform_0, window_bounds = array<i64: 16, 32>}, {transform_indices = @transform_1, window_bounds = array<i64: 16, 192>}, {transform_indices = @transform_2, window_bounds = array<i64: 1, 1, 6>}]} {
    %c0_i32 = arith.constant 0 : i32
    %0 = arith.cmpi eq, %arg1, %c0_i32 : i32
    %1 = arith.extui %0 : i1 to i32
    %c0_i32_0 = arith.constant 0 : i32
    %2 = arith.cmpi ne, %1, %c0_i32_0 : i32
    scf.if %2 {
      %cst_18 = arith.constant 0.000000e+00 : f32
      %50 = vector.broadcast %cst_18 : f32 to vector<16x6xf32>
      %c0_19 = arith.constant 0 : index
      %c0_20 = arith.constant 0 : index
      %51 = vector.load %arg5[%c0_19, %c0_20] : memref<16x6xf32, #tpu.memory_space<vmem>>, vector<16x6xf32>
      tpu.vector_store %arg5[%c0_19, %c0_20], %50 {strides = array<i32>} : memref<16x6xf32, #tpu.memory_space<vmem>>, vector<16x6xf32>,
    } else {
    }
    %c0 = arith.constant 0 : index
    %c0_1 = arith.constant 0 : index
    %3 = vector.load %arg2[%c0, %c0_1] : memref<16x32xbf16, #tpu.memory_space<vmem>>, vector<16x32xbf16>
    %4 = arith.extf %3 : vector<16x32xbf16> to vector<16x32xf32>
    %c0_2 = arith.constant 0 : index
    %c0_3 = arith.constant 0 : index
    %5 = vector.load %arg3[%c0_2, %c0_3] : memref<16x192xbf16, #tpu.memory_space<vmem>>, vector<16x192xbf16>
    %6 = arith.extf %5 : vector<16x192xbf16> to vector<16x192xf32>
    %7 = tpu.concatenate %4, %4, %4, %4, %4, %4 in 1 : vector<16x32xf32>, vector<16x32xf32>, vector<16x32xf32>, vector<16x32xf32>, vector<16x32xf32>, vector<16x32xf32> -> vector<16x192xf32>
    %8 = arith.mulf %7, %6 : vector<16x192xf32>
    %9 = tpu.iota {dimensions = array<i32: 0>} : vector<192x6xi32>
    %10 = tpu.iota {dimensions = array<i32: 1>} : vector<192x6xi32>
    %c32_i32 = arith.constant 32 : i32
    %11 = vector.broadcast %c32_i32 : i32 to vector<192x6xi32>
    %12 = arith.muli %10, %11 : vector<192x6xi32>
    %13 = arith.cmpi sge, %9, %12 : vector<192x6xi32>
    %c1_i32 = arith.constant 1 : i32
    %14 = vector.broadcast %c1_i32 : i32 to vector<192x6xi32>
    %15 = arith.addi %10, %14 : vector<192x6xi32>
    %c32_i32_4 = arith.constant 32 : i32
    %16 = vector.broadcast %c32_i32_4 : i32 to vector<192x6xi32>
    %17 = arith.muli %15, %16 : vector<192x6xi32>
    %18 = arith.cmpi slt, %9, %17 : vector<192x6xi32>
    %19 = arith.andi %13, %18 : vector<192x6xi1>
    %c0_i32_5 = arith.constant 0 : i32
    %20 = vector.broadcast %c0_i32_5 : i32 to vector<192x6xi32>
    %21 = arith.cmpi eq, %10, %20 : vector<192x6xi32>
    %cst = arith.constant 1.000000e+00 : f32
    %cst_6 = arith.constant -1.000000e+00 : f32
    %22 = vector.broadcast %cst : f32 to vector<192x6xf32>
    %23 = vector.broadcast %cst_6 : f32 to vector<192x6xf32>
    %24 = arith.select %21, %22, %23 : vector<192x6xi1>, vector<192x6xf32>
    %cst_7 = arith.constant 0.000000e+00 : f32
    %25 = vector.broadcast %cst_7 : f32 to vector<192x6xf32>
    %26 = arith.select %19, %24, %25 : vector<192x6xi1>, vector<192x6xf32>
    %cst_8 = arith.constant dense<0.000000e+00> : vector<16x6xf32>
    %27 = tpu.matmul %8, %26, %cst_8 {dimension_numbers = #tpu.dot_dimension_numbers<[1], [0], [0], [1], [0, 0, 1, 1], [], []>} : vector<16x192xf32>, vector<192x6xf32>, vector<16x6xf32> -> vector<16x6xf32>
    %cst_9 = arith.constant 0.000000e+00 : f32
    %28 = vector.broadcast %cst_9 : f32 to vector<16x6xf32>
    %29 = arith.minimumf %27, %28 : vector<16x6xf32>
    %30 = math.absf %27 : vector<16x6xf32>
    %cst_10 = arith.constant 0.000000e+00 : f32
    %31 = vector.broadcast %cst_10 : f32 to vector<16x6xf32>
    %32 = arith.subf %31, %30 : vector<16x6xf32>
    %33 = math.exp %32 : vector<16x6xf32>
    %34 = math.log1p %33 : vector<16x6xf32>
    %35 = arith.subf %29, %34 : vector<16x6xf32>
    %c2_i32 = arith.constant 2 : i32
    %36 = arith.muli %arg0, %c2_i32 : i32
    %37 = arith.addi %36, %arg1 : i32
    %c16_i32 = arith.constant 16 : i32
    %38 = arith.muli %37, %c16_i32 : i32
    %c16_i32_11 = arith.constant 16 : i32
    %39 = arith.addi %38, %c16_i32_11 : i32
    %c50_i32 = arith.constant 50 : i32
    %40 = arith.cmpi sle, %39, %c50_i32 : i32
    %41 = arith.extui %40 : i1 to i32
    %c0_i32_12 = arith.constant 0 : i32
    %42 = arith.cmpi ne, %41, %c0_i32_12 : i32
    scf.if %42 {
      %c0_18 = arith.constant 0 : index
      %c0_19 = arith.constant 0 : index
      %50 = vector.load %arg5[%c0_18, %c0_19] : memref<16x6xf32, #tpu.memory_space<vmem>>, vector<16x6xf32>
      %51 = arith.addf %50, %35 : vector<16x6xf32>
      %c0_20 = arith.constant 0 : index
      %c0_21 = arith.constant 0 : index
      %52 = vector.load %arg5[%c0_20, %c0_21] : memref<16x6xf32, #tpu.memory_space<vmem>>, vector<16x6xf32>
      tpu.vector_store %arg5[%c0_20, %c0_21], %51 {strides = array<i32>} : memref<16x6xf32, #tpu.memory_space<vmem>>, vector<16x6xf32>,
    } else {
    }
    %c16_i32_13 = arith.constant 16 : i32
    %43 = arith.addi %38, %c16_i32_13 : i32
    %c50_i32_14 = arith.constant 50 : i32
    %44 = arith.cmpi sgt, %43, %c50_i32_14 : i32
    %45 = arith.extui %44 : i1 to i32
    %c0_i32_15 = arith.constant 0 : i32
    %46 = arith.cmpi ne, %45, %c0_i32_15 : i32
    scf.if %46 {
      %50 = tpu.iota {dimensions = array<i32: 0>} : vector<16x6xi32>
      %51 = vector.broadcast %38 : i32 to vector<16x6xi32>
      %52 = arith.addi %51, %50 : vector<16x6xi32>
      %c0_18 = arith.constant 0 : index
      %c0_19 = arith.constant 0 : index
      %53 = vector.load %arg5[%c0_18, %c0_19] : memref<16x6xf32, #tpu.memory_space<vmem>>, vector<16x6xf32>
      %c50_i32_20 = arith.constant 50 : i32
      %54 = vector.broadcast %c50_i32_20 : i32 to vector<16x6xi32>
      %55 = arith.cmpi slt, %52, %54 : vector<16x6xi32>
      %cst_21 = arith.constant 0.000000e+00 : f32
      %56 = vector.broadcast %cst_21 : f32 to vector<16x6xf32>
      %57 = arith.select %55, %35, %56 : vector<16x6xi1>, vector<16x6xf32>
      %58 = arith.addf %53, %57 : vector<16x6xf32>
      %c0_22 = arith.constant 0 : index
      %c0_23 = arith.constant 0 : index
      %59 = vector.load %arg5[%c0_22, %c0_23] : memref<16x6xf32, #tpu.memory_space<vmem>>, vector<16x6xf32>
      tpu.vector_store %arg5[%c0_22, %c0_23], %58 {strides = array<i32>} : memref<16x6xf32, #tpu.memory_space<vmem>>, vector<16x6xf32>,
    } else {
    }
    %c1_i32_16 = arith.constant 1 : i32
    %47 = arith.cmpi eq, %arg1, %c1_i32_16 : i32
    %48 = arith.extui %47 : i1 to i32
    %c0_i32_17 = arith.constant 0 : i32
    %49 = arith.cmpi ne, %48, %c0_i32_17 : i32
    scf.if %49 {
      %c0_18 = arith.constant 0 : index
      %c0_19 = arith.constant 0 : index
      %50 = vector.load %arg5[%c0_18, %c0_19] : memref<16x6xf32, #tpu.memory_space<vmem>>, vector<16x6xf32>
      %cst_20 = arith.constant dense<0.000000e+00> : vector<6xf32>
      %51 = vector.multi_reduction <add>, %50, %cst_20 [0] : vector<16x6xf32> to vector<6xf32>
      %52 = vector.shape_cast %51 : vector<6xf32> to vector<1x6xf32>
      %53 = vector.shape_cast %52 : vector<1x6xf32> to vector<1x1x6xf32>
      %c0_21 = arith.constant 0 : index
      %c0_22 = arith.constant 0 : index
      %c0_23 = arith.constant 0 : index
      %54 = vector.load %arg4[%c0_21, %c0_22, %c0_23] : memref<1x1x6xf32, #tpu.memory_space<vmem>>, vector<1x1x6xf32>
      tpu.vector_store %arg4[%c0_21, %c0_22, %c0_23], %53 {strides = array<i32>} : memref<1x1x6xf32, #tpu.memory_space<vmem>>, vector<1x1x6xf32>,
    } else {
    }
    return
  }
  func.func @transform_0(%arg0: i32, %arg1: i32) -> (i32, i32) {
    %c2_i32 = arith.constant 2 : i32
    %0 = arith.muli %arg0, %c2_i32 : i32
    %1 = arith.addi %0, %arg1 : i32
    %c0_i32 = arith.constant 0 : i32
    %c0_i32_0 = arith.constant 0 : i32
    return %1, %c0_i32 : i32, i32
  }
  func.func @transform_1(%arg0: i32, %arg1: i32) -> (i32, i32) {
    %c2_i32 = arith.constant 2 : i32
    %0 = arith.muli %arg0, %c2_i32 : i32
    %1 = arith.addi %0, %arg1 : i32
    %c0_i32 = arith.constant 0 : i32
    %c0_i32_0 = arith.constant 0 : i32
    return %1, %c0_i32 : i32, i32
  }
  func.func @transform_2(%arg0: i32, %arg1: i32) -> (i32, i32, i32) {
    %c0_i32 = arith.constant 0 : i32
    %c0_i32_0 = arith.constant 0 : i32
    %c0_i32_1 = arith.constant 0 : i32
    return %arg0, %c0_i32, %c0_i32_0 : i32, i32, i32
  }
}

</mosaic_0001>

<llo_original>
// kernel: tpu_custom_call.1
$region0: #{tpu_custom_call.1}
  #allocation0 [shape = 'u32[]', space=smem, size = 0x4, offset = 0x4, fixed_abs, tag = 'smem constant byte address 0x4 - core index']
  #allocation1 [shape = 'u32[144,128]{1,0:T(1,128)}', space=vmem, size = 0x12000, scoped, tag = 'internal scratch']
  #allocation2 [shape = 'f32[16,6]{1,0:T(8,128)}', space=vmem, size = 0x2000, scoped, tag = 'scratch operand']
  %s0 = inlined_call_operand.vmem [shape: bf16[64,32], index: 0, kind: input, shape index: {}]
  %s1 = inlined_call_operand.hbm [shape: bf16[64,192], index: 1, kind: input, shape index: {}]
  %s2 = inlined_call_operand.hbm [shape: f32[2,1,6], index: 2, kind: output, shape index: {}]
  %s3 = sld [smem:[#allocation0]]
  $region61: #{tpu_custom_call.1} parent=0
    _
  %s5 = ssub.s32 1, %s3
  %s6 = scalar_select 0, %s5, %s3
  $region1: #{tpu_custom_call.1} parent=0
    #allocation3 [shape = 'u8[16384]{0}', space=vmem, size = 0x4000, scoped, tag = 'input window, operand 1']
    #allocation4 [shape = 's32[2]{0}', space=sflag, size = 0x8, scoped, tag = 'scoped memory for tpu_custom_call.1']
    #allocation5 [shape = 's32[2]{0}', space=sflag, size = 0x8, scoped, tag = 'scoped memory for tpu_custom_call.1']
    #allocation6 [shape = 'u8[1024]{0}', space=vmem, size = 0x400, scoped, tag = 'output window, operand 0']
    %7 = vsyncpa [#allocation4], 0
    %s8 = scalar_lea.sflag [#allocation4], 1
    %9 = vsyncpa %s8, 0
    %10 = vsyncpa [#allocation5], 0
    %s11 = scalar_lea.sflag [#allocation5], 1
    %12 = vsyncpa %s11, 0
    loop: start=0, step=1, limit=6
    $region2: #{tpu_custom_call.1} parent=1 // loop_pre_header
      _
    $region3: #{tpu_custom_call.1} parent=1 // loop_header
      %s14 = sphi 0, %s18
      %p15 = scmp.ge.s32.totalorder %s14, 6
      %s21 = sphi 0, %s33
      %s22 = sphi 0, %s29
      %s23 = sphi 0, %s21
      %s24 = sphi 0, %s22
      %s25 = sphi 0, %s23
      %s26 = sphi 0, %s24
      %s40 = sphi 0, %s42
      %s43 = sphi 0, %s40
      %s44 = sphi 0, %s43
      %s60 = sphi 0, %s44
      %s70 = sphi 0, %s72
      %s73 = sphi 0, %s70
      %s74 = sphi 0, %s73
      %s90 = sphi 0, %s74
      %s96 = sphi 0, %s98
      %s99 = sphi 0, %s96
      %s100 = sphi 0, %s99
      %s116 = sphi 0, %s100
    $region4: #{tpu_custom_call.1} parent=1 // loop_header_branch
      %17 = sbr.rel (%p15) target = $region8
    $region5: #{tpu_custom_call.1} parent=1 // loop_body
      %s19 = ssub.s32 %s14, 1
      %s20 = ssub.s32 %s14, 2
      %s27 = sadd.s32 1, %s22
      %p28 = scmp.ge.s32.totalorder %s27, 2
      %s29 = scalar_select %p28, 0, %s27
      %s30 = sadd.s32 1, %s21
      %s31 = scalar_select %p28, %s30, %s21
      %p32 = scmp.ge.s32.totalorder %s31, 2
      %s33 = scalar_select %p32, 0, %s31
      %s34 = smul.u32 %s21, 2
      %s35 = sadd.s32 %s34, %s22
      %s36 = smul.u32 %s33, 2
      %s37 = sadd.s32 %s36, %s29
      %s38 = ssub.s32 %s35, %s37
      %p39 = scmp.eq.s32.totalorder %s38, 0
      %s41 = sadd.s32 %s40, 1
      %s42 = scalar_select %p39, %s40, %s41
      %p45 = pneg %p39
      %p46 = scmp.eq.s32.totalorder %s14, 3
      %p47 = por %p45, %p46
      %p48 = scmp.ne.s32.totalorder %s40, %s43
      %p49 = scmp.eq.s32.totalorder %s14, 0
      %p50 = por %p48, %p49
      %p51 = scmp.ne.s32.totalorder %s40, %s43
      %p52 = scmp.eq.s32.totalorder %s19, 3
      %p53 = por %p51, %p52
      %p54 = scmp.ne.s32.totalorder %s43, %s44
      %p55 = scmp.eq.s32.totalorder %s19, 0
      %p56 = por %p54, %p55
      %p57 = scmp.ne.s32.totalorder %s43, %s44
      %p58 = scmp.eq.s32.totalorder %s20, 3
      %p59 = por %p57, %p58
      %p61 = scmp.ne.s32.totalorder %s44, %s60
      %p62 = scmp.eq.s32.totalorder %s20, 0
      %p63 = por %p61, %p62
      %s64 = smul.u32 %s21, 2
      %s65 = sadd.s32 %s64, %s22
      %s66 = smul.u32 %s33, 2
      %s67 = sadd.s32 %s66, %s29
      %s68 = ssub.s32 %s65, %s67
      %p69 = scmp.eq.s32.totalorder %s68, 0
      %s71 = sadd.s32 %s70, 1
      %s72 = scalar_select %p69, %s70, %s71
      %p75 = pneg %p69
      %p76 = scmp.eq.s32.totalorder %s14, 3
      %p77 = por %p75, %p76
      %p78 = scmp.ne.s32.totalorder %s70, %s73
      %p79 = scmp.eq.s32.totalorder %s14, 0
      %p80 = por %p78, %p79
      %p81 = scmp.ne.s32.totalorder %s70, %s73
      %p82 = scmp.eq.s32.totalorder %s19, 3
      %p83 = por %p81, %p82
      %p84 = scmp.ne.s32.totalorder %s73, %s74
      %p85 = scmp.eq.s32.totalorder %s19, 0
      %p86 = por %p84, %p85
      %p87 = scmp.ne.s32.totalorder %s73, %s74
      %p88 = scmp.eq.s32.totalorder %s20, 3
      %p89 = por %p87, %p88
      %p91 = scmp.ne.s32.totalorder %s74, %s90
      %p92 = scmp.eq.s32.totalorder %s20, 0
      %p93 = por %p91, %p92
      %s94 = ssub.s32 %s21, %s33
      %p95 = scmp.eq.s32.totalorder %s94, 0
      %s97 = sadd.s32 %s96, 1
      %s98 = scalar_select %p95, %s96, %s97
      %p101 = pneg %p95
      %p102 = scmp.eq.s32.totalorder %s14, 3
      %p103 = por %p101, %p102
      %p104 = scmp.ne.s32.totalorder %s96, %s99
      %p105 = scmp.eq.s32.totalorder %s14, 0
      %p106 = por %p104, %p105
      %p107 = scmp.ne.s32.totalorder %s96, %s99
      %p108 = scmp.eq.s32.totalorder %s19, 3
      %p109 = por %p107, %p108
      %p110 = scmp.ne.s32.totalorder %s99, %s100
      %p111 = scmp.eq.s32.totalorder %s19, 0
      %p112 = por %p110, %p111
      %p113 = scmp.ne.s32.totalorder %s99, %s100
      %p114 = scmp.eq.s32.totalorder %s20, 3
      %p115 = por %p113, %p114
      %p117 = scmp.ne.s32.totalorder %s100, %s116
      %p118 = scmp.eq.s32.totalorder %s20, 0
      %p119 = por %p117, %p118
      %p120 = scmp.le.s32.totalorder 1, %s14
      %p121 = scmp.lt.s32.totalorder %s14, 5
      %p122 = pnand %p120, %p121
      %p123 = pneg %p122
      // Predicated region
      $region9: #{tpu_custom_call.1} parent=5 // pred_check
        _
      $region10: #{tpu_custom_call.1} parent=5 // pred_check_branch
        %125 = sbr.rel (%p122) target = $region12
      $region11: #{tpu_custom_call.1} parent=5 // pred_region
        %s126 = ssub.s32 %s14, 1
      $region12: #{tpu_custom_call.1} parent=5 // pred_fallthru
        _
      %p127 = scmp.lt.s32.totalorder %s14, 4
      // Predicated region
      $region13: #{tpu_custom_call.1} parent=5 // pred_check
        %p128 = pneg %p127
      $region14: #{tpu_custom_call.1} parent=5 // pred_check_branch
        %130 = sbr.rel (%p128) target = $region16
      $region15: #{tpu_custom_call.1} parent=5 // pred_region
        // Predicated region
        $region17: #{tpu_custom_call.1} parent=15 // pred_check
          %p131 = pneg %p50
        $region18: #{tpu_custom_call.1} parent=15 // pred_check_branch
          %133 = sbr.rel (%p131) target = $region20
        $region19: #{tpu_custom_call.1} parent=15 // pred_region
          %s134 = smul.u32 %s21, 2
          %s135 = sadd.s32 %s134, %s22
          %s136 = smul.u32 2, %s135
          %p137 = scmp.lt.s32.totalorder %s136, 7
          %s138 = scalar_select %p137, %s136, 7
          %s139 = smul.addr %s138, 4
          %s140 = scalar_lea.vmem %s0, %s139
          %s141 = smul.u32 %s21, 2
          %s142 = sadd.s32 %s141, %s22
          %s143 = smul.u32 2, %s142
        $region20: #{tpu_custom_call.1} parent=15 // pred_fallthru
          _
        // Predicated region
        $region21: #{tpu_custom_call.1} parent=15 // pred_check
          %p144 = pneg %p80
        $region22: #{tpu_custom_call.1} parent=15 // pred_check_branch
          %146 = sbr.rel (%p144) target = $region24
        $region23: #{tpu_custom_call.1} parent=15 // pred_region
          %s147 = sand.u32 %s70, 1
          %s148 = scalar_lea.sflag [#allocation4], %s147
          %s149 = sand.u32 %s70, 1
          %s150 = smul.addr %s149, 16
          %s151 = scalar_lea.vmem [#allocation3], %s150
          %s152 = smul.u32 %s21, 2
          %s153 = sadd.s32 %s152, %s22
          %s154 = smul.u32 2, %s153
          %s156 = ssub.s32 256, 256
          %157 = vsyncadd %s148, %s156
          %s158 = smul.addr %s154, 2
          %s159 = smul.addr %s158, 64
          %s160 = scalar_lea.hbm %s1, %s159
          %s161 = sshll.u32 %s151, 4
          %s162 = int_to_ptr.vmem [resolvable:$true] %s161
          %167 = dma.hbm_to_vmem [thread:$0]  %s160, 256, %s162, %s148, 128, 128, 8
        $region24: #{tpu_custom_call.1} parent=15 // pred_fallthru
          _
      $region16: #{tpu_custom_call.1} parent=5 // pred_fallthru
        _
      %p168 = scmp.le.s32.totalorder 1, %s14
      %p169 = scmp.lt.s32.totalorder %s14, 5
      %p170 = pnand %p168, %p169
      %p171 = pneg %p170
      // Predicated region
      $region25: #{tpu_custom_call.1} parent=5 // pred_check
        _
      $region26: #{tpu_custom_call.1} parent=5 // pred_check_branch
        %173 = sbr.rel (%p170) target = $region28
      $region27: #{tpu_custom_call.1} parent=5 // pred_region
        %s174 = ssub.s32 %s14, 1
        %s175 = sand.u32 %s73, 1
        %s176 = scalar_lea.sflag [#allocation4], %s175
        %s177 = sand.u32 %s73, 1
        %s178 = smul.addr %s177, 16
        %s179 = scalar_lea.vmem [#allocation3], %s178
        // Predicated region
        $region29: #{tpu_custom_call.1} parent=27 // pred_check
          %p180 = pneg %p86
        $region30: #{tpu_custom_call.1} parent=27 // pred_check_branch
          %182 = sbr.rel (%p180) target = $region32
        $region31: #{tpu_custom_call.1} parent=27 // pred_region
          %183 = dma.done %s176, 256
        $region32: #{tpu_custom_call.1} parent=27 // pred_fallthru
          _
        %s184 = smul.u32 %s23, 2
        %s185 = sadd.s32 %s184, %s24
        %s186 = smul.u32 2, %s185
        %p187 = scmp.lt.s32.totalorder %s186, 7
        %s188 = scalar_select %p187, %s186, 7
        %s189 = smul.addr %s188, 4
        %s190 = scalar_lea.vmem %s0, %s189
        %p191 = pneg %p56
        %p192 = pneg %p53
        %s193 = sand.u32 %s73, 1
        %s194 = scalar_lea.sflag [#allocation4], %s193
        %s195 = sand.u32 %s73, 1
        %s196 = smul.addr %s195, 16
        %s197 = scalar_lea.vmem [#allocation3], %s196
        %p198 = pneg %p86
        %p199 = pneg %p83
        %p200 = pneg %p112
        %p201 = pneg %p109
        %s202 = sand.u32 %s99, 1
        %s203 = scalar_lea.sflag [#allocation5], %s202
        %s204 = sand.u32 %s99, 1
        %s205 = scalar_lea.vmem [#allocation6], %s204
        %s206 = smul.u32 %s23, 2
        %s207 = sadd.s32 %s206, %s24
        %s208 = smul.u32 2, %s207
        %p209 = scmp.lt.s32.totalorder %s208, 7
        %s210 = scalar_select %p209, %s208, 7
        %s211 = smul.addr %s210, 4
        %s212 = scalar_lea.vmem %s0, %s211
        %s213 = smul.u32 %s23, 2
        %s214 = sadd.s32 %s213, %s24
        %s215 = smul.u32 2, %s214
        %s216 = smul.u32 %s23, 2
        %s217 = sadd.s32 %s216, %s24
        %s218 = smul.u32 2, %s217
        %p219 = scmp.eq.s32.totalorder %s24, 0
        // Predicated region
        $region33: #{tpu_custom_call.1} parent=27 // pred_check
          %p220 = pneg %p219
        $region34: #{tpu_custom_call.1} parent=27 // pred_check_branch
          %222 = sbr.rel (%p220) target = $region36
        $region35: #{tpu_custom_call.1} parent=27 // pred_region
          %vm223 = vcmask 48128
          %224 = vst.msk [vmem:[#allocation2] sm:$0xff] %vm223, 0.0
          %225 = vst.msk [vmem:[#allocation2 + $0x8] sm:$0xff] %vm223, 0.0
        $region36: #{tpu_custom_call.1} parent=27 // pred_fallthru
          _
        %v226 = vld [vmem:[%s212] sm:$0xf]
        %v227 = vld [vmem:[%s212 + $0x4] sm:$0xf]
        %v228 = vunpack.c.l.bf16 %v226
        %v229 = vunpack.c.l.bf16 %v227
        %v230 = vld [vmem:[%s179] sm:$0xff]
        %v231 = vld [vmem:[%s179 + $0x8] sm:$0xff]
        %v232 = vunpack.c.l.bf16 %v230
        %v233 = vunpack.c.h.bf16 %v230
        %v234 = vunpack.c.l.bf16 %v231
        %v235 = vunpack.c.h.bf16 %v231
        %238 = vrot.lane.b32.xlu0 %v228, 32
        %v239 = vpop.permute.xlu0 %238
        %240 = vrot.lane.b32.xlu0 %v229, 32
        %v241 = vpop.permute.xlu0 %240
        %244 = vrot.lane.b32.xlu0 %v228, 64
        %v245 = vpop.permute.xlu0 %244
        %246 = vrot.lane.b32.xlu0 %v229, 64
        %v247 = vpop.permute.xlu0 %246
        %250 = vrot.lane.b32.xlu0 %v228, 96
        %v251 = vpop.permute.xlu0 %250
        %252 = vrot.lane.b32.xlu0 %v229, 96
        %v253 = vpop.permute.xlu0 %252
        %vm256 = vcmask 261120
        %v257 = vsel %vm256, %v228, %v239
        %v258 = vsel %vm256, %v229, %v241
        %vm259 = vcmask 523264
        %v260 = vsel %vm259, %v257, %v245
        %v261 = vsel %vm259, %v258, %v247
        %vm262 = vcmask 785408
        %v263 = vsel %vm262, %v260, %v251
        %v264 = vsel %vm262, %v261, %v253
        %v265 = vmul.f32 %v263, %v232
        %v266 = vmul.f32 %v257, %v233
        %v267 = vmul.f32 %v264, %v234
        %v268 = vmul.f32 %v258, %v235
        %v269 = vlaneseq
        %v270 = vshrl.u32 %v269, 7
        %v271 = vadd.s32 %v270, 8
        %v272 = vadd.s32 %v270, 16
        %v273 = vadd.s32 %v270, 24
        %v274 = vadd.s32 %v270, 32
        %v275 = vadd.s32 %v270, 40
        %v276 = vadd.s32 %v270, 48
        %v277 = vadd.s32 %v270, 56
        %v278 = vadd.s32 %v270, 64
        %v279 = vadd.s32 %v270, 72
        %v280 = vadd.s32 %v270, 80
        %v281 = vadd.s32 %v270, 88
        %v282 = vadd.s32 %v270, 96
        %v283 = vadd.s32 %v270, 104
        %v284 = vadd.s32 %v270, 112
        %v285 = vadd.s32 %v270, 120
        %v286 = vadd.s32 %v270, 128
        %v287 = vadd.s32 %v270, 136
        %v288 = vadd.s32 %v270, 144
        %v289 = vadd.s32 %v270, 152
        %v290 = vadd.s32 %v270, 160
        %v291 = vadd.s32 %v270, 168
        %v292 = vadd.s32 %v270, 176
        %v293 = vadd.s32 %v270, 184
        %v294 = vlaneseq
        %v295 = vand.u32 %v294, 127
        %v296 = vmul.u32 %v295, 32
        %vm297 = vcmp.ge.s32.totalorder %v270, %v296
        %vm298 = vcmp.ge.s32.totalorder %v271, %v296
        %vm299 = vcmp.ge.s32.totalorder %v272, %v296
        %vm300 = vcmp.ge.s32.totalorder %v273, %v296
        %vm301 = vcmp.ge.s32.totalorder %v274, %v296
        %vm302 = vcmp.ge.s32.totalorder %v275, %v296
        %vm303 = vcmp.ge.s32.totalorder %v276, %v296
        %vm304 = vcmp.ge.s32.totalorder %v277, %v296
        %vm305 = vcmp.ge.s32.totalorder %v278, %v296
        %vm306 = vcmp.ge.s32.totalorder %v279, %v296
        %vm307 = vcmp.ge.s32.totalorder %v280, %v296
        %vm308 = vcmp.ge.s32.totalorder %v281, %v296
        %vm309 = vcmp.ge.s32.totalorder %v282, %v296
        %vm310 = vcmp.ge.s32.totalorder %v283, %v296
        %vm311 = vcmp.ge.s32.totalorder %v284, %v296
        %vm312 = vcmp.ge.s32.totalorder %v285, %v296
        %vm313 = vcmp.ge.s32.totalorder %v286, %v296
        %vm314 = vcmp.ge.s32.totalorder %v287, %v296
        %vm315 = vcmp.ge.s32.totalorder %v288, %v296
        %vm316 = vcmp.ge.s32.totalorder %v289, %v296
        %vm317 = vcmp.ge.s32.totalorder %v290, %v296
        %vm318 = vcmp.ge.s32.totalorder %v291, %v296
        %vm319 = vcmp.ge.s32.totalorder %v292, %v296
        %vm320 = vcmp.ge.s32.totalorder %v293, %v296
        %v321 = vadd.s32 %v295, 1
        %v322 = vmul.u32 %v321, 32
        %vm323 = vcmp.lt.s32.totalorder %v270, %v322
        %vm324 = vcmp.lt.s32.totalorder %v271, %v322
        %vm325 = vcmp.lt.s32.totalorder %v272, %v322
        %vm326 = vcmp.lt.s32.totalorder %v273, %v322
        %vm327 = vcmp.lt.s32.totalorder %v274, %v322
        %vm328 = vcmp.lt.s32.totalorder %v275, %v322
        %vm329 = vcmp.lt.s32.totalorder %v276, %v322
        %vm330 = vcmp.lt.s32.totalorder %v277, %v322
        %vm331 = vcmp.lt.s32.totalorder %v278, %v322
        %vm332 = vcmp.lt.s32.totalorder %v279, %v322
        %vm333 = vcmp.lt.s32.totalorder %v280, %v322
        %vm334 = vcmp.lt.s32.totalorder %v281, %v322
        %vm335 = vcmp.lt.s32.totalorder %v282, %v322
        %vm336 = vcmp.lt.s32.totalorder %v283, %v322
        %vm337 = vcmp.lt.s32.totalorder %v284, %v322
        %vm338 = vcmp.lt.s32.totalorder %v285, %v322
        %vm339 = vcmp.lt.s32.totalorder %v286, %v322
        %vm340 = vcmp.lt.s32.totalorder %v287, %v322
        %vm341 = vcmp.lt.s32.totalorder %v288, %v322
        %vm342 = vcmp.lt.s32.totalorder %v289, %v322
        %vm343 = vcmp.lt.s32.totalorder %v290, %v322
        %vm344 = vcmp.lt.s32.totalorder %v291, %v322
        %vm345 = vcmp.lt.s32.totalorder %v292, %v322
        %vm346 = vcmp.lt.s32.totalorder %v293, %v322
        %vm347 = vmand %vm297, %vm323
        %vm348 = vmand %vm298, %vm324
        %vm349 = vmand %vm299, %vm325
        %vm350 = vmand %vm300, %vm326
        %vm351 = vmand %vm301, %vm327
        %vm352 = vmand %vm302, %vm328
        %vm353 = vmand %vm303, %vm329
        %vm354 = vmand %vm304, %vm330
        %vm355 = vmand %vm305, %vm331
        %vm356 = vmand %vm306, %vm332
        %vm357 = vmand %vm307, %vm333
        %vm358 = vmand %vm308, %vm334
        %vm359 = vmand %vm309, %vm335
        %vm360 = vmand %vm310, %vm336
        %vm361 = vmand %vm311, %vm337
        %vm362 = vmand %vm312, %vm338
        %vm363 = vmand %vm313, %vm339
        %vm364 = vmand %vm314, %vm340
        %vm365 = vmand %vm315, %vm341
        %vm366 = vmand %vm316, %vm342
        %vm367 = vmand %vm317, %vm343
        %vm368 = vmand %vm318, %vm344
        %vm369 = vmand %vm319, %vm345
        %vm370 = vmand %vm320, %vm346
        %vm371 = vcmp.eq.s32.totalorder %v295, 0
        %v372 = vsel %vm371, 1.0, -1.0
        %v373 = vsel %vm347, %v372, 0.0
        %v374 = vsel %vm348, %v372, 0.0
        %v375 = vsel %vm349, %v372, 0.0
        %v376 = vsel %vm350, %v372, 0.0
        %v377 = vsel %vm351, %v372, 0.0
        %v378 = vsel %vm352, %v372, 0.0
        %v379 = vsel %vm353, %v372, 0.0
        %v380 = vsel %vm354, %v372, 0.0
        %v381 = vsel %vm355, %v372, 0.0
        %v382 = vsel %vm356, %v372, 0.0
        %v383 = vsel %vm357, %v372, 0.0
        %v384 = vsel %vm358, %v372, 0.0
        %v385 = vsel %vm359, %v372, 0.0
        %v386 = vsel %vm360, %v372, 0.0
        %v387 = vsel %vm361, %v372, 0.0
        %v388 = vsel %vm362, %v372, 0.0
        %v389 = vsel %vm363, %v372, 0.0
        %v390 = vsel %vm364, %v372, 0.0
        %v391 = vsel %vm365, %v372, 0.0
        %v392 = vsel %vm366, %v372, 0.0
        %v393 = vsel %vm367, %v372, 0.0
        %v394 = vsel %vm368, %v372, 0.0
        %v395 = vsel %vm369, %v372, 0.0
        %v396 = vsel %vm370, %v372, 0.0
        %v398 = vsel %vm259, %v266, 0
        %v401 = vsel %vm259, %v268, 0
        %403 = vmatprep.subr.mxu0 0.0
        %404 = vmatpush1.msra.mxu0 %v373
        %405 = vmatprep.subr.mxu0 0.0
        %406 = vmatpush1.msra.mxu0 %v374
        %407 = vmatprep.subr.mxu0 0.0
        %408 = vmatpush1.msra.mxu0 %v375
        %409 = vmatprep.subr.mxu0 0.0
        %410 = vmatpush1.msra.mxu0 %v376
        %411 = vmatprep.subr.mxu0 0.0
        %412 = vmatpush1.msra.mxu0 %v377
        %413 = vmatprep.subr.mxu0 0.0
        %414 = vmatpush1.msra.mxu0 %v378
        %415 = vmatprep.subr.mxu0 0.0
        %416 = vmatpush1.msra.mxu0 %v379
        %417 = vmatprep.subr.mxu0 0.0
        %418 = vmatpush1.msra.mxu0 %v380
        %419 = vmatprep.subr.mxu0 0.0
        %420 = vmatpush1.msra.mxu0 %v381
        %421 = vmatprep.subr.mxu0 0.0
        %422 = vmatpush1.msra.mxu0 %v382
        %423 = vmatprep.subr.mxu0 0.0
        %424 = vmatpush1.msra.mxu0 %v383
        %425 = vmatprep.subr.mxu0 0.0
        %426 = vmatpush1.msra.mxu0 %v384
        %427 = vmatprep.subr.mxu0 0.0
        %428 = vmatpush1.msra.mxu0 %v385
        %429 = vmatprep.subr.mxu0 0.0
        %430 = vmatpush1.msra.mxu0 %v386
        %431 = vmatprep.subr.mxu0 0.0
        %432 = vmatpush1.msra.mxu0 %v387
        %433 = vmatprep.subr.mxu0 0.0
        %434 = vmatpush1.msra.mxu0 %v388
        %435 = vmatprep.subr.mxu0 0.0
        %436 = vmatpush1.msra.mxu0 %v389
        %437 = vmatprep.subr.mxu0 0.0
        %438 = vmatpush1.msra.mxu0 %v390
        %439 = vmatprep.subr.mxu0 0.0
        %440 = vmatpush1.msra.mxu0 %v391
        %441 = vmatprep.subr.mxu0 0.0
        %442 = vmatpush1.msra.mxu0 %v392
        %443 = vmatprep.subr.mxu0 0.0
        %444 = vmatpush1.msra.mxu0 %v393
        %445 = vmatprep.subr.mxu0 0.0
        %446 = vmatpush1.msra.mxu0 %v394
        %447 = vmatprep.subr.mxu0 0.0
        %448 = vmatpush1.msra.mxu0 %v395
        %449 = vmatprep.subr.mxu0 0.0
        %450 = vmatpush1.msra.mxu0 %v396
        %451 = vmatprep.subr.mxu0 0.0
        %452 = vmatpush1.msra.mxu0 0.0
        %453 = vmatprep.subr.mxu0 0.0
        %454 = vmatpush1.msra.mxu0 0.0
        %455 = vmatprep.subr.mxu0 0.0
        %456 = vmatpush1.msra.mxu0 0.0
        %457 = vmatprep.subr.mxu0 0.0
        %458 = vmatpush1.msra.mxu0 0.0
        %459 = vmatprep.subr.mxu0 0.0
        %460 = vmatpush1.msra.mxu0 0.0
        %461 = vmatprep.subr.mxu0 0.0
        %462 = vmatpush1.msra.mxu0 0.0
        %463 = vmatprep.subr.mxu0 0.0
        %464 = vmatpush1.msra.mxu0 0.0
        %465 = vmatprep.subr.mxu0 0.0
        %466 = vmatpush1.msra.mxu0 0.0
        %467 = vmatprep.mubr.f32.mxu0 %v398
        %468 = vmatmul.mubr.f32.gmra.mrb[0].mxu0 %v265
        %v469 = vpop.f32.mrb[0].mxu0
        %v470 = vadd.f32 0.0, %v469
        %v471 = vpop.f32.mrb[0].mxu0
        %472 = vmatprep.mubr.f32.mxu0 %v401
        %473 = vmatmul.mubr.f32.gmra.mrb[0].mxu0 %v267
        %v474 = vpop.f32.mrb[0].mxu0
        %v475 = vadd.f32 0.0, %v474
        %v476 = vpop.f32.mrb[0].mxu0
        %477 = vdwg.mxu0
        %v478 = vmin.f32 %v470, 0.0
        %v479 = vmin.f32 %v475, 0.0
        %v480 = vand.u32 2147483647, %v470
        %v481 = vand.u32 2147483647, %v475
        %v482 = vsub.f32 0.0, %v480
        %v483 = vsub.f32 0.0, %v481
        %v484 = vmul.f32 %v482, 1.442695
        %v485 = vpow.pop %v484
        %v486 = vmul.f32 %v483, 1.442695
        %v487 = vpow.pop %v486
        %v488 = vadd.f32 %v485, 1.0
        %v489 = vlog2.pop %v488
        %v490 = vmul.f32 %v489, 0.6931472
        %v491 = vmul.f32 -0.5, %v485
        %v492 = vadd.f32 %v491, 1.0
        %v493 = vmul.f32 %v492, %v485
        %v494 = vand.u32 2147483647, %v485
        %vm495 = vcmp.lt.f32.partialorder %v494, 0.0004427343
        %v496 = vsel %vm495, %v493, %v490
        %v497 = vadd.f32 %v487, 1.0
        %v498 = vlog2.pop %v497
        %v499 = vmul.f32 %v498, 0.6931472
        %v500 = vmul.f32 -0.5, %v487
        %v501 = vadd.f32 %v500, 1.0
        %v502 = vmul.f32 %v501, %v487
        %v503 = vand.u32 2147483647, %v487
        %vm504 = vcmp.lt.f32.partialorder %v503, 0.0004427343
        %v505 = vsel %vm504, %v502, %v499
        %v506 = vsub.f32 %v478, %v496
        %v507 = vsub.f32 %v479, %v505
        %s508 = smul.u32 %s23, 2
        %s509 = sadd.s32 %s508, %s24
        %s510 = smul.u32 %s509, 16
        %s511 = sadd.s32 %s510, 16
        %p512 = scmp.le.s32.totalorder %s511, 50
        // Predicated region
        $region37: #{tpu_custom_call.1} parent=27 // pred_check
          %p513 = pneg %p512
        $region38: #{tpu_custom_call.1} parent=27 // pred_check_branch
          %515 = sbr.rel (%p513) target = $region40
        $region39: #{tpu_custom_call.1} parent=27 // pred_region
          %v516 = vld [vmem:[#allocation2] sm:$0xff]
          %v517 = vld [vmem:[#allocation2 + $0x8] sm:$0xff]
          %v518 = vadd.f32 %v516, %v506
          %v519 = vadd.f32 %v517, %v507
          %vm520 = vcmask 48128
          %521 = vst.msk [vmem:[#allocation2] sm:$0xff] %vm520, %v518
          %522 = vst.msk [vmem:[#allocation2 + $0x8] sm:$0xff] %vm520, %v519
        $region40: #{tpu_custom_call.1} parent=27 // pred_fallthru
          _
        %p523 = scmp.gt.s32.totalorder %s511, 50
        // Predicated region
        $region41: #{tpu_custom_call.1} parent=27 // pred_check
          %p524 = pneg %p523
        $region42: #{tpu_custom_call.1} parent=27 // pred_check_branch
          %526 = sbr.rel (%p524) target = $region44
        $region43: #{tpu_custom_call.1} parent=27 // pred_region
          %v527 = vstv %s510
          %v528 = vadd.s32 %v527, %v270
          %v529 = vadd.s32 %v527, %v271
          %v530 = vld [vmem:[#allocation2] sm:$0xff]
          %v531 = vld [vmem:[#allocation2 + $0x8] sm:$0xff]
          %vm532 = vcmp.lt.s32.totalorder %v528, 50
          %vm533 = vcmp.lt.s32.totalorder %v529, 50
          %v534 = vsel %vm532, %v506, 0.0
          %v535 = vsel %vm533, %v507, 0.0
          %v536 = vadd.f32 %v530, %v534
          %v537 = vadd.f32 %v531, %v535
          %vm538 = vcmask 48128
          %539 = vst.msk [vmem:[#allocation2] sm:$0xff] %vm538, %v536
          %540 = vst.msk [vmem:[#allocation2 + $0x8] sm:$0xff] %vm538, %v537
        $region44: #{tpu_custom_call.1} parent=27 // pred_fallthru
          _
        %p541 = scmp.eq.s32.totalorder %s24, 1
        // Predicated region
        $region45: #{tpu_custom_call.1} parent=27 // pred_check
          %p542 = pneg %p541
        $region46: #{tpu_custom_call.1} parent=27 // pred_check_branch
          %544 = sbr.rel (%p542) target = $region48
        $region47: #{tpu_custom_call.1} parent=27 // pred_region
          %v545 = vld [vmem:[#allocation2] sm:$0xff]
          %v546 = vld [vmem:[#allocation2 + $0x8] sm:$0xff]
          %vm547 = vcmask 48128
          %v548 = vsel %vm547, %v545, 0.0
          %v549 = vsel %vm547, %v546, 0.0
          %v550 = vadd.f32 %v548, %v549
          %v551 = vrot.slane %v550, 4
          %v552 = vadd.f32 %v550, %v551
          %v553 = vrot.slane %v552, 2
          %v554 = vadd.f32 %v552, %v553
          %v555 = vrot.slane %v554, 1
          %v556 = vadd.f32 %v554, %v555
          %vm557 = vcmask 40960
          %558 = vst.msk [vmem:[%s205] sm:$0x1] %vm557, %v556
        $region48: #{tpu_custom_call.1} parent=27 // pred_fallthru
          _
        %s559 = sand.u32 %s99, 1
        %s560 = scalar_lea.sflag [#allocation5], %s559
        %s561 = sand.u32 %s99, 1
        %s562 = scalar_lea.vmem [#allocation6], %s561
        // Predicated region
        $region49: #{tpu_custom_call.1} parent=27 // pred_check
          %p563 = pneg %p109
        $region50: #{tpu_custom_call.1} parent=27 // pred_check_branch
          %565 = sbr.rel (%p563) target = $region52
        $region51: #{tpu_custom_call.1} parent=27 // pred_region
          %s567 = ssub.s32 16, 16
          %568 = vsyncadd %s560, %s567
          %s569 = smul.addr %s23, 16
          %s570 = scalar_lea.hbm %s2, %s569
          %s572 = sshll.u32 %s562, 4
          %s573 = int_to_ptr.vmem [resolvable:$true] %s572
          %575 = dma.vmem_to_hbm [thread:$0]  %s573, 16, %s570, %s560
        $region52: #{tpu_custom_call.1} parent=27 // pred_fallthru
          _
      $region28: #{tpu_custom_call.1} parent=5 // pred_fallthru
        _
      %p576 = scmp.le.s32.totalorder 2, %s14
      // Predicated region
      $region53: #{tpu_custom_call.1} parent=5 // pred_check
        %p577 = pneg %p576
      $region54: #{tpu_custom_call.1} parent=5 // pred_check_branch
        %579 = sbr.rel (%p577) target = $region56
      $region55: #{tpu_custom_call.1} parent=5 // pred_region
        %s580 = ssub.s32 %s14, 2
        // Predicated region
        $region57: #{tpu_custom_call.1} parent=55 // pred_check
          %p581 = pneg %p115
        $region58: #{tpu_custom_call.1} parent=55 // pred_check_branch
          %583 = sbr.rel (%p581) target = $region60
        $region59: #{tpu_custom_call.1} parent=55 // pred_region
          %s584 = sand.u32 %s100, 1
          %s585 = scalar_lea.sflag [#allocation5], %s584
          %s586 = sand.u32 %s100, 1
          %s587 = scalar_lea.vmem [#allocation6], %s586
          %588 = dma.done %s585, 16
        $region60: #{tpu_custom_call.1} parent=55 // pred_fallthru
          _
      $region56: #{tpu_custom_call.1} parent=5 // pred_fallthru
        _
    $region6: #{tpu_custom_call.1} parent=1 // loop_footer
      %s18 = sadd.s32 1, %s14
    $region7: #{tpu_custom_call.1} parent=1 // loop_footer_branch
      %13 = sbr.rel target = $region3
    $region8: #{tpu_custom_call.1} parent=1 // loop_exit
      _
    %589 = vsyncpa [#allocation4], 1
    %s590 = scalar_lea.sflag [#allocation4], 1
    %591 = vsyncpa %s590, 1
    %592 = vsyncpa [#allocation5], 1
    %s593 = scalar_lea.sflag [#allocation5], 1
    %594 = vsyncpa %s593, 1

</llo_original>
